<compile_context>
chip_gen: v6e
topology: v6e:2x2x1
jax: 0.10.0
libtpu: 0.0.40
codegen_flags: <defaults>
</compile_context>

<pallas_src>
import functools

import jax
import jax.numpy as jnp
from jax import lax
from jax.experimental import pallas as pl
from jax.experimental.pallas import tpu as pltpu


def _conv3x3_kernel(x_ref, w_ref, b_ref, m_ref, o_ref, *, H, W, B):
    """B images per grid step.

    x_ref : (B, Cp, HWp)    flat images: spatial axis zero-padded by W+1 per
                            side, channels zero-padded to the sublane tile Cp.
    w_ref : (Cout, 9*Cp)    weights; column index = (ky*3 + kx)*Cp + c.
    b_ref : (Cout, 1)       bias.
    m_ref : (8, H*W)        grid-invariant edge masks (rows 0..3 =
                            left, right, top, bottom as 0/1).
    o_ref : (B, Cout, H*W)  output images, flattened spatial (lane dense).
    """
    HW = H * W
    Cp = x_ref.shape[1]

    # Hoisted, grid-invariant edge masks (precomputed in the wrapper: no
    # per-step iota / % / // work).  Broadcast once, reuse for every image.
    left = jnp.broadcast_to(m_ref[0:1, :] != 0, (Cp, HW))
    right = jnp.broadcast_to(m_ref[1:2, :] != 0, (Cp, HW))
    top = jnp.broadcast_to(m_ref[2:3, :] != 0, (Cp, HW))
    bot = jnp.broadcast_to(m_ref[3:4, :] != 0, (Cp, HW))

    def im2col(b):
        # Raw tap windows: for tap (ky, kx) the lane window starting at
        # ky*W + kx holds x[y+ky-1, x+kx-1] at every interior position.
        # Contiguous lane-offset loads -- no strided slice / reshape copies.
        def window(ky, kx):
            start = ky * W + kx
            return x_ref[b, :, start:start + HW]            # (Cp, HW)

        # Left/right reflection fix-ups, computed exactly once per tap.
        col_fixed = []
        for ky in range(3):
            w0, w1, w2 = (window(ky, kx) for kx in range(3))
            col_fixed.append([
                jnp.where(left, w2, w0),     # col -1 -> col +1
                w1,
                jnp.where(right, w0, w2),    # col W  -> col W-2
            ])

        # Top/bottom reflection fix-ups on the memoized col-fixed taps
        # (corners automatically mirror to (1, 1) etc.).
        taps = []
        for ky in range(3):
            for kx in range(3):
                v = col_fixed[ky][kx]
                if ky == 0:
                    v = jnp.where(top, col_fixed[2][kx], v)   # row -1 -> +1
                elif ky == 2:
                    v = jnp.where(bot, col_fixed[0][kx], v)   # row H -> H-2
                taps.append(v)
        # im2col slab (9*Cp, HW); every piece is sublane-tile aligned.
        return jnp.concatenate(taps, axis=0)

    # One stationary-weight MXU matmul over all B images in this block.
    if B > 1:
        rhs = jnp.concatenate([im2col(b) for b in range(B)], axis=1)
    else:
        rhs = im2col(0)                                       # (9*Cp, B*HW)

    acc = jnp.dot(w_ref[...], rhs, preferred_element_type=jnp.float32)
    acc = acc + b_ref[...].astype(jnp.float32)                # (Cout, B*HW)

    # Lane-dense, 128-lane-aligned per-image stores (HW is a multiple of 128).
    for b in range(B):
        o_ref[b] = acc[:, b * HW:(b + 1) * HW].astype(o_ref.dtype)


def conv3x3_pallas(x_nchw, weight, bias, *, images_per_step=None):
    """ReflectionPad2d(1) + Conv2d(3x3) forward, matching PyTorch Conv3x3.

    x_nchw : (N, Cin, H, W)
    weight : (Cout, Cin, 3, 3)   (PyTorch conv weight layout)
    bias   : (Cout,)
    returns: (N, Cout, H, W)
    """
    N, Cin, H, W = x_nchw.shape
    Cout = weight.shape[0]
    if H < 2 or W < 2:
        raise ValueError("ReflectionPad2d(1) requires H >= 2 and W >= 2")
    HW = H * W

    # Channel pad to the dtype's sublane tile (8 for f32, 16 bf16, 32 int8).
    itemsize = jnp.dtype(x_nchw.dtype).itemsize
    sublane = 8 * (4 // itemsize)
    Cp = ((Cin + sublane - 1) // sublane) * sublane
    HWp = HW + 2 * (W + 1)          # flat spatial axis padded by W+1 per side

    # Images per grid step: batch as much as possible while keeping >= 2 grid
    # steps (both v7x TensorCores busy); cap B to bound per-step VMEM.
    if images_per_step is None:
        images_per_step = max(1, min(8, N // 2)) if N >= 2 else 1
    B = int(images_per_step)
    G = pl.cdiv(N, B)
    Np = G * B

    # Glue: free reshape + one small zero-pad (no reflect-padded HBM image
    # copy, no transposes).  Batch is zero-padded to G*B and sliced off after.
    x_flat = jnp.pad(x_nchw.reshape(N, Cin, HW),
                     ((0, Np - N), (0, Cp - Cin), (W + 1, W + 1)))

    # Weights -> (Cout, 9*Cp), column index (ky*3+kx)*Cp + c; padded channels
    # get zero columns.  Bias -> (Cout, 1).
    w = jnp.transpose(weight, (0, 2, 3, 1))                   # (Cout, 3, 3, Cin)
    w = jnp.pad(w, ((0, 0), (0, 0), (0, 0), (0, Cp - Cin)))
    w = w.reshape(Cout, 9 * Cp).astype(x_nchw.dtype)
    b = bias.reshape(Cout, 1).astype(x_nchw.dtype)

    # Grid-invariant edge masks, hoisted out of the kernel body; rows are
    # left / right / top / bottom, zero-padded to 8 sublanes.
    pos = jnp.arange(HW, dtype=jnp.int32)
    col, row = pos % W, pos // W
    masks = jnp.stack([col == 0, col == W - 1, row == 0, row == H - 1], 0)
    masks = jnp.pad(masks.astype(jnp.int32), ((0, 4), (0, 0)))   # (8, HW)

    kernel = functools.partial(_conv3x3_kernel, H=H, W=W, B=B)

    # VMEM budget: double-buffered x/out blocks + resident w/b/masks + the
    # (9*Cp, B*HW) im2col temporary (largest in-kernel object) with slack.
    est = itemsize * (2 * B * Cp * HWp + 2 * B * Cout * HW
                      + 2 * (Cout * 9 * Cp + Cout + 8 * HW)
                      + 3 * 9 * Cp * B * HW)
    vmem_limit = int(min(64 << 20, max(32 << 20, 2 * est)))

    out_flat = pl.pallas_call(
        kernel,
        out_shape=jax.ShapeDtypeStruct((Np, Cout, HW), x_nchw.dtype),
        grid_spec=pltpu.PrefetchScalarGridSpec(
            num_scalar_prefetch=0,
            grid=(G,),
            in_specs=[
                pl.BlockSpec((B, Cp, HWp), lambda n: (n, 0, 0)),
                pl.BlockSpec((Cout, 9 * Cp), lambda n: (0, 0)),
                pl.BlockSpec((Cout, 1), lambda n: (0, 0)),
                pl.BlockSpec((8, HW), lambda n: (0, 0)),
            ],
            out_specs=pl.BlockSpec((B, Cout, HW), lambda n: (n, 0, 0)),
        ),
        compiler_params=pltpu.CompilerParams(
            dimension_semantics=("parallel",),
            vmem_limit_bytes=vmem_limit),
    )(x_flat, w, b, masks)

    return out_flat[:N].reshape(N, Cout, H, W)


def _reference_conv3x3(x_nchw, weight, bias):
    """Pure-JAX reference (reflection pad + valid 3x3 conv), NCHW."""
    x_pad = jnp.pad(x_nchw, ((0, 0), (0, 0), (1, 1), (1, 1)), mode="reflect")
    out = lax.conv_general_dilated(
        x_pad, weight, window_strides=(1, 1), padding="VALID",
        dimension_numbers=("NCHW", "OIHW", "NCHW"))
    return out + bias[None, :, None, None]


if __name__ == "__main__":
    # Small shapes consistent with the module: N=2, Cin=4, Cout=8, H=W=16.
    N, Cin, Cout, H, W = 2, 4, 8, 16, 16

    key = jax.random.PRNGKey(0)
    kx, kw, kb = jax.random.split(key, 3)

    x = jax.random.normal(kx, (N, Cin, H, W), dtype=jnp.float32)
    # Deterministic "Kaiming-uniform-like" init for the 3x3 conv parameters.
    fan_in = Cin * 3 * 3
    bound = 1.0 / (fan_in ** 0.5)
    weight = jax.random.uniform(kw, (Cout, Cin, 3, 3),
                                minval=-bound, maxval=bound, dtype=jnp.float32)
    bias = jax.random.uniform(kb, (Cout,),
                              minval=-bound, maxval=bound, dtype=jnp.float32)

    out = conv3x3_pallas(x, weight, bias)
    out = jax.block_until_ready(out)

    ref = _reference_conv3x3(x, weight, bias)
    assert out.shape == (N, Cout, H, W)
    assert jnp.allclose(out, ref, atol=1e-4, rtol=1e-4), "mismatch vs reference"

    print("KERNEL_OK")
</pallas_src>

<mosaic_0001>
module attributes {stable_mosaic.version = 11 : i64} {
  func.func @_conv3x3_kernel(%arg0: i32, %arg1: memref<1x8x290xf32, #tpu.memory_space<vmem>>, %arg2: memref<8x72xf32, #tpu.memory_space<vmem>>, %arg3: memref<8x1xf32, #tpu.memory_space<vmem>>, %arg4: memref<8x256xi32, #tpu.memory_space<vmem>>, %arg5: memref<1x8x256xf32, #tpu.memory_space<vmem>>) attributes {dimension_semantics = [#tpu.dimension_semantics<parallel>], iteration_bounds = array<i64: 2>, scalar_prefetch = 0 : i64, scratch_operands = 0 : i64, tpu.core_type = #tpu.core_type<tc>, window_params = [{transform_indices = @transform_0, window_bounds = array<i64: 1, 8, 290>}, {pipeline_mode = #tpu.pipeline_mode<synchronous>, transform_indices = @transform_1, window_bounds = array<i64: 8, 72>}, {pipeline_mode = #tpu.pipeline_mode<synchronous>, transform_indices = @transform_2, window_bounds = array<i64: 8, 1>}, {pipeline_mode = #tpu.pipeline_mode<synchronous>, transform_indices = @transform_3, window_bounds = array<i64: 8, 256>}, {transform_indices = @transform_4, window_bounds = array<i64: 1, 8, 256>}]} {
    %c0 = arith.constant 0 : index
    %c0_0 = arith.constant 0 : index
    %0 = vector.load %arg4[%c0, %c0_0] : memref<8x256xi32, #tpu.memory_space<vmem>>, vector<1x256xi32>
    %c0_i32 = arith.constant 0 : i32
    %1 = vector.broadcast %c0_i32 : i32 to vector<1x256xi32>
    %2 = arith.cmpi ne, %0, %1 : vector<1x256xi32>
    %3 = vector.shape_cast %2 : vector<1x256xi1> to vector<1x256xi1>
    %4 = vector.broadcast %3 : vector<1x256xi1> to vector<8x256xi1>
    %c1 = arith.constant 1 : index
    %c0_1 = arith.constant 0 : index
    %5 = vector.load %arg4[%c1, %c0_1] : memref<8x256xi32, #tpu.memory_space<vmem>>, vector<1x256xi32>
    %c0_i32_2 = arith.constant 0 : i32
    %6 = vector.broadcast %c0_i32_2 : i32 to vector<1x256xi32>
    %7 = arith.cmpi ne, %5, %6 : vector<1x256xi32>
    %8 = vector.shape_cast %7 : vector<1x256xi1> to vector<1x256xi1>
    %9 = vector.broadcast %8 : vector<1x256xi1> to vector<8x256xi1>
    %c2 = arith.constant 2 : index
    %c0_3 = arith.constant 0 : index
    %10 = vector.load %arg4[%c2, %c0_3] : memref<8x256xi32, #tpu.memory_space<vmem>>, vector<1x256xi32>
    %c0_i32_4 = arith.constant 0 : i32
    %11 = vector.broadcast %c0_i32_4 : i32 to vector<1x256xi32>
    %12 = arith.cmpi ne, %10, %11 : vector<1x256xi32>
    %13 = vector.shape_cast %12 : vector<1x256xi1> to vector<1x256xi1>
    %14 = vector.broadcast %13 : vector<1x256xi1> to vector<8x256xi1>
    %c3 = arith.constant 3 : index
    %c0_5 = arith.constant 0 : index
    %15 = vector.load %arg4[%c3, %c0_5] : memref<8x256xi32, #tpu.memory_space<vmem>>, vector<1x256xi32>
    %c0_i32_6 = arith.constant 0 : i32
    %16 = vector.broadcast %c0_i32_6 : i32 to vector<1x256xi32>
    %17 = arith.cmpi ne, %15, %16 : vector<1x256xi32>
    %18 = vector.shape_cast %17 : vector<1x256xi1> to vector<1x256xi1>
    %19 = vector.broadcast %18 : vector<1x256xi1> to vector<8x256xi1>
    %c0_7 = arith.constant 0 : index
    %c0_8 = arith.constant 0 : index
    %c0_9 = arith.constant 0 : index
    %20 = vector.load %arg1[%c0_7, %c0_8, %c0_9] : memref<1x8x290xf32, #tpu.memory_space<vmem>>, vector<1x8x256xf32>
    %21 = vector.shape_cast %20 : vector<1x8x256xf32> to vector<8x256xf32>
    %c0_10 = arith.constant 0 : index
    %c0_11 = arith.constant 0 : index
    %c1_12 = arith.constant 1 : index
    %22 = vector.load %arg1[%c0_10, %c0_11, %c1_12] : memref<1x8x290xf32, #tpu.memory_space<vmem>>, vector<1x8x256xf32>
    %23 = vector.shape_cast %22 : vector<1x8x256xf32> to vector<8x256xf32>
    %c0_13 = arith.constant 0 : index
    %c0_14 = arith.constant 0 : index
    %c2_15 = arith.constant 2 : index
    %24 = vector.load %arg1[%c0_13, %c0_14, %c2_15] : memref<1x8x290xf32, #tpu.memory_space<vmem>>, vector<1x8x256xf32>
    %25 = vector.shape_cast %24 : vector<1x8x256xf32> to vector<8x256xf32>
    %26 = arith.select %4, %25, %21 : vector<8x256xi1>, vector<8x256xf32>
    %27 = arith.select %9, %21, %25 : vector<8x256xi1>, vector<8x256xf32>
    %c0_16 = arith.constant 0 : index
    %c0_17 = arith.constant 0 : index
    %c16 = arith.constant 16 : index
    %28 = vector.load %arg1[%c0_16, %c0_17, %c16] : memref<1x8x290xf32, #tpu.memory_space<vmem>>, vector<1x8x256xf32>
    %29 = vector.shape_cast %28 : vector<1x8x256xf32> to vector<8x256xf32>
    %c0_18 = arith.constant 0 : index
    %c0_19 = arith.constant 0 : index
    %c17 = arith.constant 17 : index
    %30 = vector.load %arg1[%c0_18, %c0_19, %c17] : memref<1x8x290xf32, #tpu.memory_space<vmem>>, vector<1x8x256xf32>
    %31 = vector.shape_cast %30 : vector<1x8x256xf32> to vector<8x256xf32>
    %c0_20 = arith.constant 0 : index
    %c0_21 = arith.constant 0 : index
    %c18 = arith.constant 18 : index
    %32 = vector.load %arg1[%c0_20, %c0_21, %c18] : memref<1x8x290xf32, #tpu.memory_space<vmem>>, vector<1x8x256xf32>
    %33 = vector.shape_cast %32 : vector<1x8x256xf32> to vector<8x256xf32>
    %34 = arith.select %4, %33, %29 : vector<8x256xi1>, vector<8x256xf32>
    %35 = arith.select %9, %29, %33 : vector<8x256xi1>, vector<8x256xf32>
    %c0_22 = arith.constant 0 : index
    %c0_23 = arith.constant 0 : index
    %c32 = arith.constant 32 : index
    %36 = vector.load %arg1[%c0_22, %c0_23, %c32] : memref<1x8x290xf32, #tpu.memory_space<vmem>>, vector<1x8x256xf32>
    %37 = vector.shape_cast %36 : vector<1x8x256xf32> to vector<8x256xf32>
    %c0_24 = arith.constant 0 : index
    %c0_25 = arith.constant 0 : index
    %c33 = arith.constant 33 : index
    %38 = vector.load %arg1[%c0_24, %c0_25, %c33] : memref<1x8x290xf32, #tpu.memory_space<vmem>>, vector<1x8x256xf32>
    %39 = vector.shape_cast %38 : vector<1x8x256xf32> to vector<8x256xf32>
    %c0_26 = arith.constant 0 : index
    %c0_27 = arith.constant 0 : index
    %c34 = arith.constant 34 : index
    %40 = vector.load %arg1[%c0_26, %c0_27, %c34] : memref<1x8x290xf32, #tpu.memory_space<vmem>>, vector<1x8x256xf32>
    %41 = vector.shape_cast %40 : vector<1x8x256xf32> to vector<8x256xf32>
    %42 = arith.select %4, %41, %37 : vector<8x256xi1>, vector<8x256xf32>
    %43 = arith.select %9, %37, %41 : vector<8x256xi1>, vector<8x256xf32>
    %44 = arith.select %14, %42, %26 : vector<8x256xi1>, vector<8x256xf32>
    %45 = arith.select %14, %39, %23 : vector<8x256xi1>, vector<8x256xf32>
    %46 = arith.select %14, %43, %27 : vector<8x256xi1>, vector<8x256xf32>
    %47 = arith.select %19, %26, %42 : vector<8x256xi1>, vector<8x256xf32>
    %48 = arith.select %19, %23, %39 : vector<8x256xi1>, vector<8x256xf32>
    %49 = arith.select %19, %27, %43 : vector<8x256xi1>, vector<8x256xf32>
    %50 = tpu.concatenate %44, %45, %46, %34, %31, %35, %47, %48, %49 in 0 : vector<8x256xf32>, vector<8x256xf32>, vector<8x256xf32>, vector<8x256xf32>, vector<8x256xf32>, vector<8x256xf32>, vector<8x256xf32>, vector<8x256xf32>, vector<8x256xf32> -> vector<72x256xf32>
    %c0_28 = arith.constant 0 : index
    %c0_29 = arith.constant 0 : index
    %51 = vector.load %arg2[%c0_28, %c0_29] : memref<8x72xf32, #tpu.memory_space<vmem>>, vector<8x72xf32>
    %cst = arith.constant dense<0.000000e+00> : vector<8x256xf32>
    %52 = tpu.matmul %51, %50, %cst {dimension_numbers = #tpu.dot_dimension_numbers<[1], [0], [0], [1], [0, 0, 1, 1], [], []>} : vector<8x72xf32>, vector<72x256xf32>, vector<8x256xf32> -> vector<8x256xf32>
    %c0_30 = arith.constant 0 : index
    %c0_31 = arith.constant 0 : index
    %53 = vector.load %arg3[%c0_30, %c0_31] : memref<8x1xf32, #tpu.memory_space<vmem>>, vector<8x1xf32>
    %54 = vector.broadcast %53 : vector<8x1xf32> to vector<8x256xf32>
    %55 = arith.addf %52, %54 : vector<8x256xf32>
    %c0_32 = arith.constant 0 : index
    %c0_33 = arith.constant 0 : index
    %c0_34 = arith.constant 0 : index
    %56 = vector.load %arg5[%c0_32, %c0_33, %c0_34] : memref<1x8x256xf32, #tpu.memory_space<vmem>>, vector<1x8x256xf32>
    %57 = vector.shape_cast %56 : vector<1x8x256xf32> to vector<8x256xf32>
    %58 = vector.shape_cast %55 : vector<8x256xf32> to vector<1x8x256xf32>
    tpu.vector_store %arg5[%c0_32, %c0_33, %c0_34], %58 {strides = array<i32>} : memref<1x8x256xf32, #tpu.memory_space<vmem>>, vector<1x8x256xf32>,
    return
  }
  func.func @transform_0(%arg0: i32) -> (i32, i32, i32) {
    %c0_i32 = arith.constant 0 : i32
    %c0_i32_0 = arith.constant 0 : i32
    %c0_i32_1 = arith.constant 0 : i32
    return %arg0, %c0_i32, %c0_i32_0 : i32, i32, i32
  }
  func.func @transform_1(%arg0: i32) -> (i32, i32) {
    %c0_i32 = arith.constant 0 : i32
    %c0_i32_0 = arith.constant 0 : i32
    %c0_i32_1 = arith.constant 0 : i32
    return %c0_i32, %c0_i32_0 : i32, i32
  }
  func.func @transform_2(%arg0: i32) -> (i32, i32) {
    %c0_i32 = arith.constant 0 : i32
    %c0_i32_0 = arith.constant 0 : i32
    %c0_i32_1 = arith.constant 0 : i32
    return %c0_i32, %c0_i32_0 : i32, i32
  }
  func.func @transform_3(%arg0: i32) -> (i32, i32) {
    %c0_i32 = arith.constant 0 : i32
    %c0_i32_0 = arith.constant 0 : i32
    %c0_i32_1 = arith.constant 0 : i32
    return %c0_i32, %c0_i32_0 : i32, i32
  }
  func.func @transform_4(%arg0: i32) -> (i32, i32, i32) {
    %c0_i32 = arith.constant 0 : i32
    %c0_i32_0 = arith.constant 0 : i32
    %c0_i32_1 = arith.constant 0 : i32
    return %arg0, %c0_i32, %c0_i32_0 : i32, i32, i32
  }
}

</mosaic_0001>

<llo_original>
// kernel: tpu_custom_call.1
$region0: #{tpu_custom_call.1}
  #allocation0 [shape = 'u32[]', space=smem, size = 0x4, offset = 0x4, fixed_abs, tag = 'smem constant byte address 0x4 - core index']
  #allocation1 [shape = 'u32[144,128]{1,0:T(1,128)}', space=vmem, size = 0x12000, scoped, tag = 'internal scratch']
  %s0 = inlined_call_operand.hbm [shape: f32[2,8,290], index: 0, kind: input, shape index: {}]
  %s1 = inlined_call_operand.vmem [shape: f32[8,72], index: 1, kind: input, shape index: {}]
  %s2 = inlined_call_operand.vmem [shape: f32[8,1], index: 2, kind: input, shape index: {}]
  %s3 = inlined_call_operand.hbm [shape: s32[8,256], index: 3, kind: input, shape index: {}]
  %s4 = inlined_call_operand.hbm [shape: f32[2,8,256], index: 4, kind: output, shape index: {}]
  %s5 = sld [smem:[#allocation0]]
  $region57: #{tpu_custom_call.1} parent=0
    _
  %s7 = ssub.s32 1, %s5
  %s8 = scalar_select 0, %s7, %s5
  $region1: #{tpu_custom_call.1} parent=0
    #allocation2 [shape = 'u8[24576]{0}', space=vmem, size = 0x6000, scoped, tag = 'input window, operand 0']
    #allocation3 [shape = 's32[2]{0}', space=sflag, size = 0x8, scoped, tag = 'scoped memory for tpu_custom_call.1']
    #allocation4 [shape = 's32[2]{0}', space=sflag, size = 0x8, scoped, tag = 'scoped memory for tpu_custom_call.1']
    #allocation5 [shape = 'u8[8192]{0}', space=vmem, size = 0x2000, scoped, tag = 'input window, operand 3, single buffered']
    #allocation6 [shape = 's32[1]{0}', space=sflag, size = 0x4, scoped, tag = 'scoped memory for tpu_custom_call.1']
    #allocation7 [shape = 'u8[16384]{0}', space=vmem, size = 0x4000, scoped, tag = 'output window, operand 0']
    %9 = vsyncpa [#allocation3], 0
    %s10 = scalar_lea.sflag [#allocation3], 1
    %11 = vsyncpa %s10, 0
    %12 = vsyncpa [#allocation6], 0
    %13 = vsyncpa [#allocation4], 0
    %s14 = scalar_lea.sflag [#allocation4], 1
    %15 = vsyncpa %s14, 0
    loop: start=0, step=1, limit=4
    $region2: #{tpu_custom_call.1} parent=1 // loop_pre_header
      _
    $region3: #{tpu_custom_call.1} parent=1 // loop_header
      %s17 = sphi 0, %s21
      %p18 = scmp.ge.s32.totalorder %s17, 4
      %s27 = sphi 0, %s29
      %s30 = sphi 0, %s27
      %s31 = sphi 0, %s30
      %s47 = sphi 0, %s31
      %s51 = sphi 0, %s51
      %s53 = sphi 0, %s51
      %s54 = sphi 0, %s53
      %s68 = sphi 0, %s54
      %s72 = sphi 0, %s72
      %s74 = sphi 0, %s72
      %s75 = sphi 0, %s74
      %s89 = sphi 0, %s75
      %s93 = sphi 0, %s93
      %s95 = sphi 0, %s93
      %s96 = sphi 0, %s95
      %s110 = sphi 0, %s96
      %s116 = sphi 0, %s118
      %s119 = sphi 0, %s116
      %s120 = sphi 0, %s119
      %s136 = sphi 0, %s120
    $region4: #{tpu_custom_call.1} parent=1 // loop_header_branch
      %20 = sbr.rel (%p18) target = $region8
    $region5: #{tpu_custom_call.1} parent=1 // loop_body
      %s22 = ssub.s32 %s17, 1
      %s23 = ssub.s32 %s17, 2
      %s24 = sadd.s32 %s17, 1
      %s25 = ssub.s32 %s17, %s24
      %p26 = scmp.eq.s32.totalorder %s25, 0
      %s28 = sadd.s32 %s27, 1
      %s29 = scalar_select %p26, %s27, %s28
      %p32 = pneg %p26
      %p33 = scmp.eq.s32.totalorder %s17, 1
      %p34 = por %p32, %p33
      %p35 = scmp.ne.s32.totalorder %s27, %s30
      %p36 = scmp.eq.s32.totalorder %s17, 0
      %p37 = por %p35, %p36
      %p38 = scmp.ne.s32.totalorder %s27, %s30
      %p39 = scmp.eq.s32.totalorder %s22, 1
      %p40 = por %p38, %p39
      %p41 = scmp.ne.s32.totalorder %s30, %s31
      %p42 = scmp.eq.s32.totalorder %s22, 0
      %p43 = por %p41, %p42
      %p44 = scmp.ne.s32.totalorder %s30, %s31
      %p45 = scmp.eq.s32.totalorder %s23, 1
      %p46 = por %p44, %p45
      %p48 = scmp.ne.s32.totalorder %s31, %s47
      %p49 = scmp.eq.s32.totalorder %s23, 0
      %p50 = por %p48, %p49
      %s52 = sadd.s32 %s51, 1
      %p55 = scmp.eq.s32.totalorder %s17, 1
      %p56 = scmp.ne.s32.totalorder %s51, %s53
      %p57 = scmp.eq.s32.totalorder %s17, 0
      %p58 = por %p56, %p57
      %p59 = scmp.ne.s32.totalorder %s51, %s53
      %p60 = scmp.eq.s32.totalorder %s22, 1
      %p61 = por %p59, %p60
      %p62 = scmp.ne.s32.totalorder %s53, %s54
      %p63 = scmp.eq.s32.totalorder %s22, 0
      %p64 = por %p62, %p63
      %p65 = scmp.ne.s32.totalorder %s53, %s54
      %p66 = scmp.eq.s32.totalorder %s23, 1
      %p67 = por %p65, %p66
      %p69 = scmp.ne.s32.totalorder %s54, %s68
      %p70 = scmp.eq.s32.totalorder %s23, 0
      %p71 = por %p69, %p70
      %s73 = sadd.s32 %s72, 1
      %p76 = scmp.eq.s32.totalorder %s17, 1
      %p77 = scmp.ne.s32.totalorder %s72, %s74
      %p78 = scmp.eq.s32.totalorder %s17, 0
      %p79 = por %p77, %p78
      %p80 = scmp.ne.s32.totalorder %s72, %s74
      %p81 = scmp.eq.s32.totalorder %s22, 1
      %p82 = por %p80, %p81
      %p83 = scmp.ne.s32.totalorder %s74, %s75
      %p84 = scmp.eq.s32.totalorder %s22, 0
      %p85 = por %p83, %p84
      %p86 = scmp.ne.s32.totalorder %s74, %s75
      %p87 = scmp.eq.s32.totalorder %s23, 1
      %p88 = por %p86, %p87
      %p90 = scmp.ne.s32.totalorder %s75, %s89
      %p91 = scmp.eq.s32.totalorder %s23, 0
      %p92 = por %p90, %p91
      %s94 = sadd.s32 %s93, 1
      %p97 = scmp.eq.s32.totalorder %s17, 1
      %p98 = scmp.ne.s32.totalorder %s93, %s95
      %p99 = scmp.eq.s32.totalorder %s17, 0
      %p100 = por %p98, %p99
      %p101 = scmp.ne.s32.totalorder %s93, %s95
      %p102 = scmp.eq.s32.totalorder %s22, 1
      %p103 = por %p101, %p102
      %p104 = scmp.ne.s32.totalorder %s95, %s96
      %p105 = scmp.eq.s32.totalorder %s22, 0
      %p106 = por %p104, %p105
      %p107 = scmp.ne.s32.totalorder %s95, %s96
      %p108 = scmp.eq.s32.totalorder %s23, 1
      %p109 = por %p107, %p108
      %p111 = scmp.ne.s32.totalorder %s96, %s110
      %p112 = scmp.eq.s32.totalorder %s23, 0
      %p113 = por %p111, %p112
      %s114 = ssub.s32 %s17, %s24
      %p115 = scmp.eq.s32.totalorder %s114, 0
      %s117 = sadd.s32 %s116, 1
      %s118 = scalar_select %p115, %s116, %s117
      %p121 = pneg %p115
      %p122 = scmp.eq.s32.totalorder %s17, 1
      %p123 = por %p121, %p122
      %p124 = scmp.ne.s32.totalorder %s116, %s119
      %p125 = scmp.eq.s32.totalorder %s17, 0
      %p126 = por %p124, %p125
      %p127 = scmp.ne.s32.totalorder %s116, %s119
      %p128 = scmp.eq.s32.totalorder %s22, 1
      %p129 = por %p127, %p128
      %p130 = scmp.ne.s32.totalorder %s119, %s120
      %p131 = scmp.eq.s32.totalorder %s22, 0
      %p132 = por %p130, %p131
      %p133 = scmp.ne.s32.totalorder %s119, %s120
      %p134 = scmp.eq.s32.totalorder %s23, 1
      %p135 = por %p133, %p134
      %p137 = scmp.ne.s32.totalorder %s120, %s136
      %p138 = scmp.eq.s32.totalorder %s23, 0
      %p139 = por %p137, %p138
      %p140 = scmp.le.s32.totalorder 1, %s17
      %p141 = scmp.lt.s32.totalorder %s17, 3
      %p142 = pnand %p140, %p141
      %p143 = pneg %p142
      // Predicated region
      $region9: #{tpu_custom_call.1} parent=5 // pred_check
        _
      $region10: #{tpu_custom_call.1} parent=5 // pred_check_branch
        %145 = sbr.rel (%p142) target = $region12
      $region11: #{tpu_custom_call.1} parent=5 // pred_region
        %s146 = ssub.s32 %s17, 1
        // Predicated region
        $region13: #{tpu_custom_call.1} parent=11 // pred_check
          %p147 = pneg %p64
        $region14: #{tpu_custom_call.1} parent=11 // pred_check_branch
          %149 = sbr.rel (%p147) target = $region16
        $region15: #{tpu_custom_call.1} parent=11 // pred_region
          _
        $region16: #{tpu_custom_call.1} parent=11 // pred_fallthru
          _
        // Predicated region
        $region17: #{tpu_custom_call.1} parent=11 // pred_check
          %p150 = pneg %p85
        $region18: #{tpu_custom_call.1} parent=11 // pred_check_branch
          %152 = sbr.rel (%p150) target = $region20
        $region19: #{tpu_custom_call.1} parent=11 // pred_region
          _
        $region20: #{tpu_custom_call.1} parent=11 // pred_fallthru
          _
        // Predicated region
        $region21: #{tpu_custom_call.1} parent=11 // pred_check
          %p153 = pneg %p106
        $region22: #{tpu_custom_call.1} parent=11 // pred_check_branch
          %155 = sbr.rel (%p153) target = $region24
        $region23: #{tpu_custom_call.1} parent=11 // pred_region
          %s157 = ssub.s32 256, 256
          %158 = vsyncadd [#allocation6], %s157
          %s160 = sshll.u32 [#allocation5], 4
          %s161 = int_to_ptr.vmem [resolvable:$true] %s160
          %163 = dma.hbm_to_vmem [thread:$0]  %s3, 256, %s161, [#allocation6]
        $region24: #{tpu_custom_call.1} parent=11 // pred_fallthru
          _
      $region12: #{tpu_custom_call.1} parent=5 // pred_fallthru
        _
      %p164 = scmp.lt.s32.totalorder %s17, 2
      // Predicated region
      $region25: #{tpu_custom_call.1} parent=5 // pred_check
        %p165 = pneg %p164
      $region26: #{tpu_custom_call.1} parent=5 // pred_check_branch
        %167 = sbr.rel (%p165) target = $region28
      $region27: #{tpu_custom_call.1} parent=5 // pred_region
        // Predicated region
        $region29: #{tpu_custom_call.1} parent=27 // pred_check
          %p168 = pneg %p37
        $region30: #{tpu_custom_call.1} parent=27 // pred_check_branch
          %170 = sbr.rel (%p168) target = $region32
        $region31: #{tpu_custom_call.1} parent=27 // pred_region
          %s171 = sand.u32 %s27, 1
          %s172 = scalar_lea.sflag [#allocation3], %s171
          %s173 = sand.u32 %s27, 1
          %s174 = smul.addr %s173, 24
          %s175 = scalar_lea.vmem [#allocation2], %s174
          %s177 = ssub.s32 384, 384
          %178 = vsyncadd %s172, %s177
          %s179 = smul.addr %s17, 3
          %s180 = smul.addr %s179, 128
          %s181 = scalar_lea.hbm %s0, %s180
          %s183 = sshll.u32 %s175, 4
          %s184 = int_to_ptr.vmem [resolvable:$true] %s183
          %186 = dma.hbm_to_vmem [thread:$0]  %s181, 384, %s184, %s172
        $region32: #{tpu_custom_call.1} parent=27 // pred_fallthru
          _
      $region28: #{tpu_custom_call.1} parent=5 // pred_fallthru
        _
      %p187 = scmp.le.s32.totalorder 1, %s17
      %p188 = scmp.lt.s32.totalorder %s17, 3
      %p189 = pnand %p187, %p188
      %p190 = pneg %p189
      // Predicated region
      $region33: #{tpu_custom_call.1} parent=5 // pred_check
        _
      $region34: #{tpu_custom_call.1} parent=5 // pred_check_branch
        %192 = sbr.rel (%p189) target = $region36
      $region35: #{tpu_custom_call.1} parent=5 // pred_region
        %s193 = ssub.s32 %s17, 1
        %s194 = sand.u32 %s30, 1
        %s195 = scalar_lea.sflag [#allocation3], %s194
        %s196 = sand.u32 %s30, 1
        %s197 = smul.addr %s196, 24
        %s198 = scalar_lea.vmem [#allocation2], %s197
        // Predicated region
        $region37: #{tpu_custom_call.1} parent=35 // pred_check
          %p199 = pneg %p43
        $region38: #{tpu_custom_call.1} parent=35 // pred_check_branch
          %201 = sbr.rel (%p199) target = $region40
        $region39: #{tpu_custom_call.1} parent=35 // pred_region
          %202 = dma.done %s195, 384
        $region40: #{tpu_custom_call.1} parent=35 // pred_fallthru
          _
        // Predicated region
        $region41: #{tpu_custom_call.1} parent=35 // pred_check
          %p203 = pneg %p106
        $region42: #{tpu_custom_call.1} parent=35 // pred_check_branch
          %205 = sbr.rel (%p203) target = $region44
        $region43: #{tpu_custom_call.1} parent=35 // pred_region
          %206 = dma.done [#allocation6], 256
        $region44: #{tpu_custom_call.1} parent=35 // pred_fallthru
          _
        %s207 = sand.u32 %s30, 1
        %s208 = scalar_lea.sflag [#allocation3], %s207
        %s209 = sand.u32 %s30, 1
        %s210 = smul.addr %s209, 24
        %s211 = scalar_lea.vmem [#allocation2], %s210
        %p212 = pneg %p43
        %p213 = pneg %p40
        %p214 = pneg %p64
        %p215 = pneg %p61
        %p216 = pneg %p85
        %p217 = pneg %p82
        %p218 = pneg %p106
        %p219 = pneg %p103
        %p220 = pneg %p132
        %p221 = pneg %p129
        %s222 = sand.u32 %s119, 1
        %s223 = scalar_lea.sflag [#allocation4], %s222
        %s224 = sand.u32 %s119, 1
        %s225 = smul.addr %s224, 16
        %s226 = scalar_lea.vmem [#allocation7], %s225
        %v227 = vld [vmem:[#allocation5] ss:$8 sm:$0x3]
        %vm228 = vcmp.ne.s32.totalorder %v227, 0
        %v229 = vsel %vm228, 1, 0
        %v230 = vlaneseq
        %v231 = vshrl.u32 %v230, 7
        %v232 = vsub.s32 0, %v231
        %v233 = vrot.slane %v229, %v232
        %v234 = vlaneseq
        %v235 = vshrl.u32 %v234, 7
        %v236 = vsub.s32 1, %v235
        %v237 = vrot.slane %v229, %v236
        %vm238 = vcmp.eq.s32.totalorder %v233, 1
        %vm239 = vcmp.eq.s32.totalorder %v237, 1
        %s240 = scalar_lea.vmem [#allocation5], 1
        %v241 = vld [vmem:[%s240] ss:$8 sm:$0x3]
        %vm242 = vcmp.ne.s32.totalorder %v241, 0
        %v243 = vsel %vm242, 1, 0
        %v244 = vlaneseq
        %v245 = vshrl.u32 %v244, 7
        %v246 = vsub.s32 0, %v245
        %v247 = vrot.slane %v243, %v246
        %v248 = vlaneseq
        %v249 = vshrl.u32 %v248, 7
        %v250 = vsub.s32 1, %v249
        %v251 = vrot.slane %v243, %v250
        %vm252 = vcmp.eq.s32.totalorder %v247, 1
        %vm253 = vcmp.eq.s32.totalorder %v251, 1
        %s254 = scalar_lea.vmem [#allocation5], 2
        %v255 = vld [vmem:[%s254] ss:$8 sm:$0x3]
        %vm256 = vcmp.ne.s32.totalorder %v255, 0
        %v257 = vsel %vm256, 1, 0
        %v258 = vlaneseq
        %v259 = vshrl.u32 %v258, 7
        %v260 = vsub.s32 0, %v259
        %v261 = vrot.slane %v257, %v260
        %v262 = vlaneseq
        %v263 = vshrl.u32 %v262, 7
        %v264 = vsub.s32 1, %v263
        %v265 = vrot.slane %v257, %v264
        %vm266 = vcmp.eq.s32.totalorder %v261, 1
        %vm267 = vcmp.eq.s32.totalorder %v265, 1
        %s268 = scalar_lea.vmem [#allocation5], 3
        %v269 = vld [vmem:[%s268] ss:$8 sm:$0x3]
        %vm270 = vcmp.ne.s32.totalorder %v269, 0
        %v271 = vsel %vm270, 1, 0
        %v272 = vlaneseq
        %v273 = vshrl.u32 %v272, 7
        %v274 = vsub.s32 0, %v273
        %v275 = vrot.slane %v271, %v274
        %v276 = vlaneseq
        %v277 = vshrl.u32 %v276, 7
        %v278 = vsub.s32 1, %v277
        %v279 = vrot.slane %v271, %v278
        %vm280 = vcmp.eq.s32.totalorder %v275, 1
        %vm281 = vcmp.eq.s32.totalorder %v279, 1
        %v282 = vld [vmem:[%s198] sm:$0xff]
        %v283 = vld [vmem:[%s198 + $0x8] sm:$0xff]
        %v284 = vld [vmem:[%s198 + $0x10] sm:$0xff]
        %288 = vrot.lane.b32.xlu0 %v282, 126
        %v289 = vpop.permute.xlu0 %288
        %290 = vrot.lane.b32.xlu0 %v283, 126
        %v291 = vpop.permute.xlu0 %290
        %292 = vrot.lane.b32.xlu0 %v284, 126
        %v293 = vpop.permute.xlu0 %292
        %vm294 = vcmask 1031168
        %v295 = vsel %vm294, %v289, %v291
        %v296 = vsel %vm294, %v291, %v293
        %v299 = vsel %vm238, %v295, %v282
        %v300 = vsel %vm239, %v296, %v283
        %v301 = vsel %vm252, %v282, %v295
        %v302 = vsel %vm253, %v283, %v296
        %303 = vrot.lane.b32.xlu0 %v282, 110
        %v304 = vpop.permute.xlu0 %303
        %305 = vrot.lane.b32.xlu0 %v283, 110
        %v306 = vpop.permute.xlu0 %305
        %307 = vrot.lane.b32.xlu0 %v284, 110
        %v308 = vpop.permute.xlu0 %307
        %vm309 = vcmask 900096
        %v310 = vsel %vm309, %v304, %v306
        %v311 = vsel %vm309, %v306, %v308
        %314 = vrot.lane.b32.xlu0 %v282, 112
        %v315 = vpop.permute.xlu0 %314
        %316 = vrot.lane.b32.xlu0 %v283, 112
        %v317 = vpop.permute.xlu0 %316
        %318 = vrot.lane.b32.xlu0 %v284, 112
        %v319 = vpop.permute.xlu0 %318
        %vm320 = vcmask 916480
        %v321 = vsel %vm320, %v315, %v317
        %v322 = vsel %vm320, %v317, %v319
        %v325 = vsel %vm238, %v310, %v321
        %v326 = vsel %vm239, %v311, %v322
        %v327 = vsel %vm252, %v321, %v310
        %v328 = vsel %vm253, %v322, %v311
        %329 = vrot.lane.b32.xlu0 %v282, 94
        %v330 = vpop.permute.xlu0 %329
        %331 = vrot.lane.b32.xlu0 %v283, 94
        %v332 = vpop.permute.xlu0 %331
        %333 = vrot.lane.b32.xlu0 %v284, 94
        %v334 = vpop.permute.xlu0 %333
        %vm335 = vcmask 769024
        %v336 = vsel %vm335, %v330, %v332
        %v337 = vsel %vm335, %v332, %v334
        %340 = vrot.lane.b32.xlu0 %v282, 96
        %v341 = vpop.permute.xlu0 %340
        %342 = vrot.lane.b32.xlu0 %v283, 96
        %v343 = vpop.permute.xlu0 %342
        %344 = vrot.lane.b32.xlu0 %v284, 96
        %v345 = vpop.permute.xlu0 %344
        %vm346 = vcmask 785408
        %v347 = vsel %vm346, %v341, %v343
        %v348 = vsel %vm346, %v343, %v345
        %v351 = vsel %vm238, %v336, %v347
        %v352 = vsel %vm239, %v337, %v348
        %v353 = vsel %vm252, %v347, %v336
        %v354 = vsel %vm253, %v348, %v337
        %v355 = vsel %vm266, %v351, %v299
        %v356 = vsel %vm267, %v352, %v300
        %357 = vrot.lane.b32.xlu0 %v282, 95
        %v358 = vpop.permute.xlu0 %357
        %359 = vrot.lane.b32.xlu0 %v283, 95
        %v360 = vpop.permute.xlu0 %359
        %361 = vrot.lane.b32.xlu0 %v284, 95
        %v362 = vpop.permute.xlu0 %361
        %vm363 = vcmask 777216
        %v364 = vsel %vm363, %v358, %v360
        %v365 = vsel %vm363, %v360, %v362
        %368 = vrot.lane.b32.xlu0 %v282, 127
        %v369 = vpop.permute.xlu0 %368
        %370 = vrot.lane.b32.xlu0 %v283, 127
        %v371 = vpop.permute.xlu0 %370
        %372 = vrot.lane.b32.xlu0 %v284, 127
        %v373 = vpop.permute.xlu0 %372
        %vm374 = vcmask 1039360
        %v375 = vsel %vm374, %v369, %v371
        %v376 = vsel %vm374, %v371, %v373
        %v379 = vsel %vm266, %v364, %v375
        %v380 = vsel %vm267, %v365, %v376
        %v381 = vsel %vm266, %v353, %v301
        %v382 = vsel %vm267, %v354, %v302
        %v383 = vsel %vm280, %v299, %v351
        %v384 = vsel %vm281, %v300, %v352
        %v385 = vsel %vm280, %v375, %v364
        %v386 = vsel %vm281, %v376, %v365
        %v387 = vsel %vm280, %v301, %v353
        %v388 = vsel %vm281, %v302, %v354
        %389 = vrot.lane.b32.xlu0 %v282, 111
        %v390 = vpop.permute.xlu0 %389
        %391 = vrot.lane.b32.xlu0 %v283, 111
        %v392 = vpop.permute.xlu0 %391
        %393 = vrot.lane.b32.xlu0 %v284, 111
        %v394 = vpop.permute.xlu0 %393
        %vm395 = vcmask 908288
        %v396 = vsel %vm395, %v390, %v392
        %v397 = vsel %vm395, %v392, %v394
        %v400 = vld [vmem:[%s1] sm:$0xff]
        %v401 = vld [vmem:[%s2] sm:$0xff]
        %403 = vset.pattern.permute.xlu0 0
        %404 = vperm.xlu0 %403, %v401
        %v405 = vpop.permute.xlu0 %404
        %vm407 = vcmask 588800
        %v409 = vsel %vm407, %v400, 0
        %411 = vmatprep.subr.mxu0 0.0
        %412 = vmatpush1.msra.mxu0 0.0
        %413 = vmatprep.subr.mxu0 0.0
        %414 = vmatpush1.msra.mxu0 0.0
        %415 = vmatprep.subr.mxu0 0.0
        %416 = vmatpush1.msra.mxu0 0.0
        %417 = vmatprep.subr.mxu0 0.0
        %418 = vmatpush1.msra.mxu0 0.0
        %419 = vmatprep.subr.mxu0 0.0
        %420 = vmatpush1.msra.mxu0 0.0
        %421 = vmatprep.subr.mxu0 0.0
        %422 = vmatpush1.msra.mxu0 0.0
        %423 = vmatprep.subr.mxu0 0.0
        %424 = vmatpush1.msra.mxu0 0.0
        %425 = vmatprep.subr.mxu0 %v388
        %426 = vmatpush1.msra.mxu0 %v387
        %427 = vmatprep.subr.mxu0 %v386
        %428 = vmatpush1.msra.mxu0 %v385
        %429 = vmatprep.subr.mxu0 %v384
        %430 = vmatpush1.msra.mxu0 %v383
        %431 = vmatprep.subr.mxu0 %v328
        %432 = vmatpush1.msra.mxu0 %v327
        %433 = vmatprep.subr.mxu0 %v397
        %434 = vmatpush1.msra.mxu0 %v396
        %435 = vmatprep.subr.mxu0 %v326
        %436 = vmatpush1.msra.mxu0 %v325
        %437 = vmatprep.subr.mxu0 %v382
        %438 = vmatpush1.msra.mxu0 %v381
        %439 = vmatprep.subr.mxu0 %v380
        %440 = vmatpush1.msra.mxu0 %v379
        %441 = vmatprep.subr.mxu0 %v356
        %442 = vmatpush1.msra.mxu0 %v355
        %443 = vmatprep.subr.mxu0 0.0
        %444 = vmatpush2.msra.mxu0 0.0
        %445 = vmatprep.subr.mxu0 0.0
        %446 = vmatpush2.msra.mxu0 0.0
        %447 = vmatprep.subr.mxu0 0.0
        %448 = vmatpush2.msra.mxu0 0.0
        %449 = vmatprep.subr.mxu0 0.0
        %450 = vmatpush2.msra.mxu0 0.0
        %451 = vmatprep.subr.mxu0 0.0
        %452 = vmatpush2.msra.mxu0 0.0
        %453 = vmatprep.subr.mxu0 0.0
        %454 = vmatpush2.msra.mxu0 0.0
        %455 = vmatprep.subr.mxu0 0.0
        %456 = vmatpush2.msra.mxu0 0.0
        %457 = vmatprep.subr.mxu0 0.0
        %458 = vmatpush2.msra.mxu0 0.0
        %459 = vmatprep.subr.mxu0 0.0
        %460 = vmatpush2.msra.mxu0 0.0
        %461 = vmatprep.subr.mxu0 0.0
        %462 = vmatpush2.msra.mxu0 0.0
        %463 = vmatprep.subr.mxu0 0.0
        %464 = vmatpush2.msra.mxu0 0.0
        %465 = vmatprep.subr.mxu0 0.0
        %466 = vmatpush2.msra.mxu0 0.0
        %467 = vmatprep.subr.mxu0 0.0
        %468 = vmatpush2.msra.mxu0 0.0
        %469 = vmatprep.subr.mxu0 0.0
        %470 = vmatpush2.msra.mxu0 0.0
        %471 = vmatprep.subr.mxu0 0.0
        %472 = vmatpush2.msra.mxu0 0.0
        %473 = vmatprep.subr.mxu0 0.0
        %474 = vmatpush2.msra.mxu0 0.0
        %475 = vmatprep.mubr.f32.mxu0 0.0
        %476 = vmatmul.mubr.f32.gmra.mxu0 %v409
        %v477 = vpop.f32.mrf.mxu0
        %v478 = vadd.f32 %v405, %v477
        %v479 = vpop.f32.mrf.mxu0
        %v480 = vadd.f32 %v405, %v479
        %481 = vdwg.mxu0
        %482 = vst [vmem:[%s226] sm:$0xff] %v478
        %483 = vst [vmem:[%s226 + $0x8] sm:$0xff] %v480
        %s484 = sand.u32 %s119, 1
        %s485 = scalar_lea.sflag [#allocation4], %s484
        %s486 = sand.u32 %s119, 1
        %s487 = smul.addr %s486, 16
        %s488 = scalar_lea.vmem [#allocation7], %s487
        // Predicated region
        $region45: #{tpu_custom_call.1} parent=35 // pred_check
          %p489 = pneg %p129
        $region46: #{tpu_custom_call.1} parent=35 // pred_check_branch
          %491 = sbr.rel (%p489) target = $region48
        $region47: #{tpu_custom_call.1} parent=35 // pred_region
          %s493 = ssub.s32 256, 256
          %494 = vsyncadd %s485, %s493
          %s495 = smul.addr %s22, 2
          %s496 = smul.addr %s495, 128
          %s497 = scalar_lea.hbm %s4, %s496
          %s499 = sshll.u32 %s488, 4
          %s500 = int_to_ptr.vmem [resolvable:$true] %s499
          %502 = dma.vmem_to_hbm [thread:$0]  %s500, 256, %s497, %s485
        $region48: #{tpu_custom_call.1} parent=35 // pred_fallthru
          _
      $region36: #{tpu_custom_call.1} parent=5 // pred_fallthru
        _
      %p503 = scmp.le.s32.totalorder 2, %s17
      // Predicated region
      $region49: #{tpu_custom_call.1} parent=5 // pred_check
        %p504 = pneg %p503
      $region50: #{tpu_custom_call.1} parent=5 // pred_check_branch
        %506 = sbr.rel (%p504) target = $region52
      $region51: #{tpu_custom_call.1} parent=5 // pred_region
        %s507 = ssub.s32 %s17, 2
        // Predicated region
        $region53: #{tpu_custom_call.1} parent=51 // pred_check
          %p508 = pneg %p135
        $region54: #{tpu_custom_call.1} parent=51 // pred_check_branch
          %510 = sbr.rel (%p508) target = $region56
        $region55: #{tpu_custom_call.1} parent=51 // pred_region
          %s511 = sand.u32 %s120, 1
          %s512 = scalar_lea.sflag [#allocation4], %s511
          %s513 = sand.u32 %s120, 1
          %s514 = smul.addr %s513, 16
          %s515 = scalar_lea.vmem [#allocation7], %s514
          %516 = dma.done %s512, 256
        $region56: #{tpu_custom_call.1} parent=51 // pred_fallthru
          _
      $region52: #{tpu_custom_call.1} parent=5 // pred_fallthru
        _
    $region6: #{tpu_custom_call.1} parent=1 // loop_footer
      %s21 = sadd.s32 1, %s17
    $region7: #{tpu_custom_call.1} parent=1 // loop_footer_branch
      %16 = sbr.rel target = $region3
    $region8: #{tpu_custom_call.1} parent=1 // loop_exit
      _
    %517 = vsyncpa [#allocation3], 1
    %s518 = scalar_lea.sflag [#allocation3], 1
    %519 = vsyncpa %s518, 1
    %520 = vsyncpa [#allocation6], 1
    %521 = vsyncpa [#allocation4], 1
    %s522 = scalar_lea.sflag [#allocation4], 1
    %523 = vsyncpa %s522, 1

</llo_original>
